<compile_context>
chip_gen: v7x
topology: tpu7x:2x2x1
jax: 0.10.0
libtpu: 0.0.40
codegen_flags: <defaults>
</compile_context>

<pallas_src>
import functools

import jax
import jax.numpy as jnp
from jax.experimental import pallas as pl
from jax.experimental.pallas import tpu as pltpu


def _round_up(x, m):
    return (x + m - 1) // m * m


def _complex_layernorm_kernel(re_ref, im_ref, ore_ref, oim_ref, *, n_true, n_pad):
    """re/im refs: [bb, n_pad] float32 planes. Lanes >= n_true are zero padding."""
    re = re_ref[...]
    im = im_ref[...]
    bb, L = re.shape

    inv_n = jnp.float32(1.0 / n_true)
    # torch.var default is unbiased -> divide by N-1.
    inv_nm1 = jnp.float32(1.0 / (n_true - 1))

    # Complex mean over the true feature axis. Padding lanes are zero on input,
    # so they contribute nothing to these sums.
    mean_re = jnp.sum(re, axis=1, keepdims=True) * inv_n
    mean_im = jnp.sum(im, axis=1, keepdims=True) * inv_n

    dre = re - mean_re
    dim = im - mean_im
    if n_pad != n_true:
        # After centering, padded lanes would hold -mean; zero them so they stay
        # out of the second-moment sums (and the padded outputs are harmless).
        lane = jax.lax.broadcasted_iota(jnp.int32, (bb, L), 1)
        valid = lane < n_true
        dre = jnp.where(valid, dre, 0.0)
        dim = jnp.where(valid, dim, 0.0)

    var_re = jnp.sum(dre * dre, axis=1, keepdims=True) * inv_nm1 + 1e-5
    var_im = jnp.sum(dim * dim, axis=1, keepdims=True) * inv_nm1 + 1e-5
    # cross-covariance uses torch.mean (divides by N) — keep that asymmetry.
    cov = jnp.sum(dre * dim, axis=1, keepdims=True) * inv_n

    # Inverse square root of the 2x2 covariance matrix [[var_re, cov], [cov, var_im]].
    q = var_re * var_im - cov * cov
    s = jnp.sqrt(q)
    t_arg = var_re + var_im + 2.0 * s
    inv_ts = jax.lax.rsqrt(q) * jax.lax.rsqrt(t_arg)      # == 1/(t*s), EUP
    m0 = inv_ts * (var_im + s)
    m1 = inv_ts * (var_re + s)
    m2 = -inv_ts * cov

    ore_ref[...] = m0 * dre + m2 * dim
    oim_ref[...] = m2 * dre + m1 * dim


def complex_layernorm(x, *, target_tile_bytes=1 << 20, interpret=False):
    """x: complex64 array of shape [B, N]. Returns complex64 [B, N]."""
    assert x.ndim == 2, "expected [batch, features]"
    B, N = x.shape
    assert N >= 2, "unbiased variance needs at least 2 features"
    x = x.astype(jnp.complex64)

    # Mosaic has no complex dtype support: split into planar f32 planes.
    re = jnp.real(x).astype(jnp.float32)
    im = jnp.imag(x).astype(jnp.float32)

    # Pad feature lanes to a multiple of 128 (lane-dense loads/stores).
    Np = _round_up(N, 128)
    if Np != N:
        re = jnp.pad(re, ((0, 0), (0, Np - N)))
        im = jnp.pad(im, ((0, 0), (0, Np - N)))

    # Batch tile: ~target_tile_bytes per stream per grid step, multiple of 8.
    row_bytes = Np * 4
    if B <= 8:
        bb = B
    else:
        bb = max(8, (target_tile_bytes // row_bytes) // 8 * 8)
        bb = min(bb, _round_up(B, 8))
    B_pad = _round_up(B, bb)
    if B_pad != B:
        # Padded rows are zeros -> var = 1e-5, cov = 0: finite, sliced off below.
        re = jnp.pad(re, ((0, B_pad - B), (0, 0)))
        im = jnp.pad(im, ((0, B_pad - B), (0, 0)))

    spec = pl.BlockSpec((bb, Np), lambda i: (i, 0))
    ore, oim = pl.pallas_call(
        functools.partial(_complex_layernorm_kernel, n_true=N, n_pad=Np),
        out_shape=(
            jax.ShapeDtypeStruct((B_pad, Np), jnp.float32),
            jax.ShapeDtypeStruct((B_pad, Np), jnp.float32),
        ),
        grid_spec=pl.GridSpec(
            grid=(B_pad // bb,),
            in_specs=[spec, spec],
            out_specs=(spec, spec),
        ),
        compiler_params=pltpu.CompilerParams(
            dimension_semantics=("parallel",),
        ),
        interpret=interpret,
    )(re, im)

    ore = ore[:B, :N]
    oim = oim[:B, :N]
    return jax.lax.complex(ore, oim)


def _reference(x):
    """Pure-JAX reference mirroring the PyTorch module exactly. Returns (re, im)."""
    re = jnp.real(x).astype(jnp.float32)
    im = jnp.imag(x).astype(jnp.float32)
    n = re.shape[1]
    mean_re = jnp.mean(re, axis=1, keepdims=True)
    mean_im = jnp.mean(im, axis=1, keepdims=True)
    dre = re - mean_re
    dim = im - mean_im
    var_re = jnp.sum(dre * dre, axis=1, keepdims=True) / (n - 1) + 1e-5
    var_im = jnp.sum(dim * dim, axis=1, keepdims=True) / (n - 1) + 1e-5
    cov = jnp.mean(dre * dim, axis=1, keepdims=True)
    s = jnp.sqrt(var_re * var_im - cov * cov)
    t = jnp.sqrt(var_re + var_im + 2.0 * s)
    inv_ts = 1.0 / (t * s)
    m0 = inv_ts * (var_im + s)
    m1 = inv_ts * (var_re + s)
    m2 = inv_ts * (-cov)
    return m0 * dre + m2 * dim, m2 * dre + m1 * dim


if __name__ == "__main__":
    key = jax.random.PRNGKey(0)
    # Cases exercise: small batch (block == full dim), feature-lane padding
    # (N=32, N=100), and the fully aligned path (N=128).
    for (B, N) in [(8, 32), (24, 100), (16, 128)]:
        key, k_re, k_im = jax.random.split(key, 3)
        xr = jax.random.normal(k_re, (B, N), dtype=jnp.float32)
        xi = jax.random.normal(k_im, (B, N), dtype=jnp.float32)
        x = jax.lax.complex(xr, xi)

        out = jax.block_until_ready(complex_layernorm(x))
        ref_re, ref_im = _reference(x)

        assert out.shape == x.shape and out.dtype == jnp.complex64, (B, N)
        assert jnp.allclose(jnp.real(out), ref_re, atol=1e-4, rtol=1e-4), (B, N)
        assert jnp.allclose(jnp.imag(out), ref_im, atol=1e-4, rtol=1e-4), (B, N)

    print("KERNEL_OK")
</pallas_src>

<mosaic_0001>
module attributes {stable_mosaic.version = 11 : i64} {
  func.func @_complex_layernorm_kernel(%arg0: i32, %arg1: memref<8x128xf32, #tpu.memory_space<vmem>>, %arg2: memref<8x128xf32, #tpu.memory_space<vmem>>, %arg3: memref<8x128xf32, #tpu.memory_space<vmem>>, %arg4: memref<8x128xf32, #tpu.memory_space<vmem>>) attributes {dimension_semantics = [#tpu.dimension_semantics<parallel>], iteration_bounds = array<i64: 1>, scalar_prefetch = 0 : i64, scratch_operands = 0 : i64, tpu.core_type = #tpu.core_type<tc>, window_params = [{transform_indices = @transform_0, window_bounds = array<i64: 8, 128>}, {transform_indices = @transform_1, window_bounds = array<i64: 8, 128>}, {transform_indices = @transform_2, window_bounds = array<i64: 8, 128>}, {transform_indices = @transform_3, window_bounds = array<i64: 8, 128>}]} {
    %c0 = arith.constant 0 : index
    %c0_0 = arith.constant 0 : index
    %0 = vector.load %arg1[%c0, %c0_0] : memref<8x128xf32, #tpu.memory_space<vmem>>, vector<8x128xf32>
    %c0_1 = arith.constant 0 : index
    %c0_2 = arith.constant 0 : index
    %1 = vector.load %arg2[%c0_1, %c0_2] : memref<8x128xf32, #tpu.memory_space<vmem>>, vector<8x128xf32>
    %cst = arith.constant dense<0.000000e+00> : vector<8xf32>
    %2 = vector.multi_reduction <add>, %0, %cst [1] : vector<8x128xf32> to vector<8xf32>
    %3 = vector.shape_cast %2 : vector<8xf32> to vector<8x1xf32>
    %cst_3 = arith.constant 3.125000e-02 : f32
    %4 = vector.broadcast %cst_3 : f32 to vector<8x1xf32>
    %5 = arith.mulf %3, %4 : vector<8x1xf32>
    %cst_4 = arith.constant dense<0.000000e+00> : vector<8xf32>
    %6 = vector.multi_reduction <add>, %1, %cst_4 [1] : vector<8x128xf32> to vector<8xf32>
    %7 = vector.shape_cast %6 : vector<8xf32> to vector<8x1xf32>
    %cst_5 = arith.constant 3.125000e-02 : f32
    %8 = vector.broadcast %cst_5 : f32 to vector<8x1xf32>
    %9 = arith.mulf %7, %8 : vector<8x1xf32>
    %10 = vector.broadcast %5 : vector<8x1xf32> to vector<8x128xf32>
    %11 = arith.subf %0, %10 : vector<8x128xf32>
    %12 = vector.broadcast %9 : vector<8x1xf32> to vector<8x128xf32>
    %13 = arith.subf %1, %12 : vector<8x128xf32>
    %14 = tpu.iota {dimensions = array<i32: 1>} : vector<8x128xi32>
    %c32_i32 = arith.constant 32 : i32
    %15 = vector.broadcast %c32_i32 : i32 to vector<8x128xi32>
    %16 = arith.cmpi slt, %14, %15 : vector<8x128xi32>
    %cst_6 = arith.constant 0.000000e+00 : f32
    %17 = vector.broadcast %cst_6 : f32 to vector<8x128xf32>
    %18 = arith.select %16, %11, %17 : vector<8x128xi1>, vector<8x128xf32>
    %cst_7 = arith.constant 0.000000e+00 : f32
    %19 = vector.broadcast %cst_7 : f32 to vector<8x128xf32>
    %20 = arith.select %16, %13, %19 : vector<8x128xi1>, vector<8x128xf32>
    %21 = arith.mulf %18, %18 : vector<8x128xf32>
    %cst_8 = arith.constant dense<0.000000e+00> : vector<8xf32>
    %22 = vector.multi_reduction <add>, %21, %cst_8 [1] : vector<8x128xf32> to vector<8xf32>
    %23 = vector.shape_cast %22 : vector<8xf32> to vector<8x1xf32>
    %cst_9 = arith.constant 0.0322580636 : f32
    %24 = vector.broadcast %cst_9 : f32 to vector<8x1xf32>
    %25 = arith.mulf %23, %24 : vector<8x1xf32>
    %cst_10 = arith.constant 9.99999974E-6 : f32
    %26 = vector.broadcast %cst_10 : f32 to vector<8x1xf32>
    %27 = arith.addf %25, %26 : vector<8x1xf32>
    %28 = arith.mulf %20, %20 : vector<8x128xf32>
    %cst_11 = arith.constant dense<0.000000e+00> : vector<8xf32>
    %29 = vector.multi_reduction <add>, %28, %cst_11 [1] : vector<8x128xf32> to vector<8xf32>
    %30 = vector.shape_cast %29 : vector<8xf32> to vector<8x1xf32>
    %cst_12 = arith.constant 0.0322580636 : f32
    %31 = vector.broadcast %cst_12 : f32 to vector<8x1xf32>
    %32 = arith.mulf %30, %31 : vector<8x1xf32>
    %cst_13 = arith.constant 9.99999974E-6 : f32
    %33 = vector.broadcast %cst_13 : f32 to vector<8x1xf32>
    %34 = arith.addf %32, %33 : vector<8x1xf32>
    %35 = arith.mulf %18, %20 : vector<8x128xf32>
    %cst_14 = arith.constant dense<0.000000e+00> : vector<8xf32>
    %36 = vector.multi_reduction <add>, %35, %cst_14 [1] : vector<8x128xf32> to vector<8xf32>
    %37 = vector.shape_cast %36 : vector<8xf32> to vector<8x1xf32>
    %cst_15 = arith.constant 3.125000e-02 : f32
    %38 = vector.broadcast %cst_15 : f32 to vector<8x1xf32>
    %39 = arith.mulf %37, %38 : vector<8x1xf32>
    %40 = arith.mulf %27, %34 : vector<8x1xf32>
    %41 = arith.mulf %39, %39 : vector<8x1xf32>
    %42 = arith.subf %40, %41 : vector<8x1xf32>
    %43 = math.sqrt %42 : vector<8x1xf32>
    %44 = arith.addf %27, %34 : vector<8x1xf32>
    %cst_16 = arith.constant 2.000000e+00 : f32
    %45 = vector.broadcast %cst_16 : f32 to vector<8x1xf32>
    %46 = arith.mulf %45, %43 : vector<8x1xf32>
    %47 = arith.addf %44, %46 : vector<8x1xf32>
    %48 = math.rsqrt %42 : vector<8x1xf32>
    %49 = math.rsqrt %47 : vector<8x1xf32>
    %50 = arith.mulf %48, %49 : vector<8x1xf32>
    %51 = arith.addf %34, %43 : vector<8x1xf32>
    %52 = arith.mulf %50, %51 : vector<8x1xf32>
    %53 = arith.addf %27, %43 : vector<8x1xf32>
    %54 = arith.mulf %50, %53 : vector<8x1xf32>
    %cst_17 = arith.constant 0.000000e+00 : f32
    %55 = vector.broadcast %cst_17 : f32 to vector<8x1xf32>
    %56 = arith.subf %55, %50 : vector<8x1xf32>
    %57 = arith.mulf %56, %39 : vector<8x1xf32>
    %58 = vector.broadcast %52 : vector<8x1xf32> to vector<8x128xf32>
    %59 = arith.mulf %58, %18 : vector<8x128xf32>
    %60 = vector.broadcast %57 : vector<8x1xf32> to vector<8x128xf32>
    %61 = arith.mulf %60, %20 : vector<8x128xf32>
    %62 = arith.addf %59, %61 : vector<8x128xf32>
    %c0_18 = arith.constant 0 : index
    %c0_19 = arith.constant 0 : index
    %63 = vector.load %arg3[%c0_18, %c0_19] : memref<8x128xf32, #tpu.memory_space<vmem>>, vector<8x128xf32>
    tpu.vector_store %arg3[%c0_18, %c0_19], %62 {strides = array<i32>} : memref<8x128xf32, #tpu.memory_space<vmem>>, vector<8x128xf32>,
    %64 = vector.broadcast %57 : vector<8x1xf32> to vector<8x128xf32>
    %65 = arith.mulf %64, %18 : vector<8x128xf32>
    %66 = vector.broadcast %54 : vector<8x1xf32> to vector<8x128xf32>
    %67 = arith.mulf %66, %20 : vector<8x128xf32>
    %68 = arith.addf %65, %67 : vector<8x128xf32>
    %c0_20 = arith.constant 0 : index
    %c0_21 = arith.constant 0 : index
    %69 = vector.load %arg4[%c0_20, %c0_21] : memref<8x128xf32, #tpu.memory_space<vmem>>, vector<8x128xf32>
    tpu.vector_store %arg4[%c0_20, %c0_21], %68 {strides = array<i32>} : memref<8x128xf32, #tpu.memory_space<vmem>>, vector<8x128xf32>,
    return
  }
  func.func @transform_0(%arg0: i32) -> (i32, i32) {
    %c0_i32 = arith.constant 0 : i32
    %c0_i32_0 = arith.constant 0 : i32
    return %arg0, %c0_i32 : i32, i32
  }
  func.func @transform_1(%arg0: i32) -> (i32, i32) {
    %c0_i32 = arith.constant 0 : i32
    %c0_i32_0 = arith.constant 0 : i32
    return %arg0, %c0_i32 : i32, i32
  }
  func.func @transform_2(%arg0: i32) -> (i32, i32) {
    %c0_i32 = arith.constant 0 : i32
    %c0_i32_0 = arith.constant 0 : i32
    return %arg0, %c0_i32 : i32, i32
  }
  func.func @transform_3(%arg0: i32) -> (i32, i32) {
    %c0_i32 = arith.constant 0 : i32
    %c0_i32_0 = arith.constant 0 : i32
    return %arg0, %c0_i32 : i32, i32
  }
}

</mosaic_0001>

<llo_original>
// kernel: tpu_custom_call.1
$region0: #{tpu_custom_call.1}
  #allocation0 [shape = 'u32[]', space=smem, size = 0x4, offset = 0x4, fixed_abs, tag = 'smem constant byte address 0x4 - core index']
  #allocation1 [shape = 'u32[144,128]{1,0:T(1,128)}', space=vmem, size = 0x12000, scoped, tag = 'internal scratch']
  %s0 = inlined_call_operand.hbm [shape: f32[8,128], index: 0, kind: input, shape index: {}]
  %s1 = inlined_call_operand.hbm [shape: f32[8,128], index: 1, kind: input, shape index: {}]
  %s2 = inlined_call_operand.hbm [shape: f32[8,128], index: 2, kind: output, shape index: {0}]
  %s3 = inlined_call_operand.hbm [shape: f32[8,128], index: 3, kind: output, shape index: {1}]
  %4 = xla_tuple %s2, %s3
  %s5 = sld [smem:[#allocation0]]
  $region34: #{tpu_custom_call.1} parent=0
    _
  %s7 = ssub.s32 1, %s5
  %s8 = scalar_select 0, %s7, %s5
  $region1: #{tpu_custom_call.1} parent=0
    #allocation2 [shape = 'u8[4096]{0}', space=vmem, size = 0x1000, scoped, tag = 'input window, operand 0, single buffered']
    #allocation3 [shape = 's32[1]{0}', space=sflag, size = 0x4, scoped, tag = 'scoped memory for tpu_custom_call.1']
    #allocation4 [shape = 's32[1]{0}', space=sflag, size = 0x4, scoped, tag = 'scoped memory for tpu_custom_call.1']
    #allocation5 [shape = 'u8[4096]{0}', space=vmem, size = 0x1000, scoped, tag = 'input window, operand 1, single buffered']
    #allocation6 [shape = 's32[1]{0}', space=sflag, size = 0x4, scoped, tag = 'scoped memory for tpu_custom_call.1']
    #allocation7 [shape = 'u8[4096]{0}', space=vmem, size = 0x1000, scoped, tag = 'output window, operand 0, single buffered']
    #allocation8 [shape = 'u8[4096]{0}', space=vmem, size = 0x1000, scoped, tag = 'output window, operand 1, single buffered']
    #allocation9 [shape = 's32[1]{0}', space=sflag, size = 0x4, scoped, tag = 'scoped memory for tpu_custom_call.1']
    %9 = vsyncpa [#allocation3], 0
    %10 = vsyncpa [#allocation6], 0
    %11 = vsyncpa [#allocation4], 0
    %12 = vsyncpa [#allocation9], 0
    // Predicated region
    $region2: #{tpu_custom_call.1} parent=1 // pred_check
      _
    $region3: #{tpu_custom_call.1} parent=1 // pred_check_branch
      %14 = sbr.rel (0) target = $region5
    $region4: #{tpu_custom_call.1} parent=1 // pred_region
      %s16 = ssub.s32 128, 128
      %17 = vsyncadd [#allocation3], %s16
      %s19 = sshll.u32 [#allocation2], 4
      %s20 = int_to_ptr.vmem [resolvable:$true] %s19
      %22 = dma.hbm_to_vmem [thread:$0]  %s0, 128, %s20, [#allocation3]
    $region5: #{tpu_custom_call.1} parent=1 // pred_fallthru
      _
    // Predicated region
    $region6: #{tpu_custom_call.1} parent=1 // pred_check
      _
    $region7: #{tpu_custom_call.1} parent=1 // pred_check_branch
      %24 = sbr.rel (0) target = $region9
    $region8: #{tpu_custom_call.1} parent=1 // pred_region
      %s26 = ssub.s32 128, 128
      %27 = vsyncadd [#allocation6], %s26
      %s29 = sshll.u32 [#allocation5], 4
      %s30 = int_to_ptr.vmem [resolvable:$true] %s29
      %32 = dma.hbm_to_vmem [thread:$0]  %s1, 128, %s30, [#allocation6]
    $region9: #{tpu_custom_call.1} parent=1 // pred_fallthru
      _
    // Predicated region
    $region10: #{tpu_custom_call.1} parent=1 // pred_check
      _
    $region11: #{tpu_custom_call.1} parent=1 // pred_check_branch
      %34 = sbr.rel (0) target = $region13
    $region12: #{tpu_custom_call.1} parent=1 // pred_region
      %35 = dma.done [#allocation3], 128
    $region13: #{tpu_custom_call.1} parent=1 // pred_fallthru
      _
    // Predicated region
    $region14: #{tpu_custom_call.1} parent=1 // pred_check
      _
    $region15: #{tpu_custom_call.1} parent=1 // pred_check_branch
      %37 = sbr.rel (0) target = $region17
    $region16: #{tpu_custom_call.1} parent=1 // pred_region
      %38 = dma.done [#allocation6], 128
    $region17: #{tpu_custom_call.1} parent=1 // pred_fallthru
      _
    %v39 = vld [vmem:[#allocation2] sm:$0xff]
    %v40 = vld [vmem:[#allocation5] sm:$0xff]
    %41 = vadd.xlane.f32.xlu0 %v39
    %v42 = vpop.xlane.xlu0 %41
    %v43 = vmul.f32 %v42, 0.03125
    %44 = vadd.xlane.f32.xlu0 %v40
    %v45 = vpop.xlane.xlu0 %44
    %v46 = vmul.f32 %v45, 0.03125
    %v47 = vsub.f32 %v39, %v43
    %v48 = vsub.f32 %v40, %v46
    %v49 = vlaneseq
    %v50 = vand.u32 %v49, 127
    %vm51 = vcmp.lt.s32.totalorder %v50, 32
    %v52 = vsel %vm51, %v47, 0.0
    %v53 = vsel %vm51, %v48, 0.0
    %v54 = vmul.f32 %v52, %v52
    %55 = vadd.xlane.f32.xlu0 %v54
    %v56 = vpop.xlane.xlu0 %55
    %v57 = vmul.f32 %v56, 0.032258064
    %v58 = vadd.f32 %v57, 1e-05
    %v59 = vmul.f32 %v53, %v53
    %60 = vadd.xlane.f32.xlu0 %v59
    %v61 = vpop.xlane.xlu0 %60
    %v62 = vmul.f32 %v61, 0.032258064
    %v63 = vadd.f32 %v62, 1e-05
    %v64 = vmul.f32 %v52, %v53
    %65 = vadd.xlane.f32.xlu0 %v64
    %v66 = vpop.xlane.xlu0 %65
    %v67 = vmul.f32 %v66, 0.03125
    %v68 = vmul.f32 %v58, %v63
    %v69 = vmul.f32 %v67, %v67
    %v70 = vsub.f32 %v68, %v69
    %v71 = vrsqrt.pop %v70
    %v72 = vmul.f32 %v70, %v71
    %vm73 = vcmp.eq.f32.partialorder %v70, inf
    %v74 = vsel %vm73, %v70, %v72
    %vm75 = vcmp.eq.f32.partialorder %v70, 0.0
    %v76 = vand.u32 %v70, 2147483648
    %v77 = vsel %vm75, %v76, %v74
    %v78 = vadd.f32 %v58, %v63
    %v79 = vmul.f32 %v77, 2.0
    %v80 = vadd.f32 %v78, %v79
    %v81 = vrsqrt.pop %v70
    %v82 = vrsqrt.pop %v80
    %v83 = vmul.f32 %v81, %v82
    %v84 = vadd.f32 %v63, %v77
    %v85 = vmul.f32 %v83, %v84
    %v86 = vadd.f32 %v58, %v77
    %v87 = vmul.f32 %v83, %v86
    %v88 = vsub.f32 0.0, %v83
    %v89 = vmul.f32 %v88, %v67
    %v90 = vmul.f32 %v85, %v52
    %v91 = vmul.f32 %v89, %v53
    %v92 = vadd.f32 %v90, %v91
    %93 = vst [vmem:[#allocation7] sm:$0xff] %v92
    %v94 = vmul.f32 %v89, %v52
    %v95 = vmul.f32 %v87, %v53
    %v96 = vadd.f32 %v94, %v95
    %97 = vst [vmem:[#allocation8] sm:$0xff] %v96
    // Predicated region
    $region18: #{tpu_custom_call.1} parent=1 // pred_check
      _
    $region19: #{tpu_custom_call.1} parent=1 // pred_check_branch
      %99 = sbr.rel (0) target = $region21
    $region20: #{tpu_custom_call.1} parent=1 // pred_region
      %s101 = ssub.s32 128, 128
      %102 = vsyncadd [#allocation4], %s101
      %s104 = sshll.u32 [#allocation7], 4
      %s105 = int_to_ptr.vmem [resolvable:$true] %s104
      %107 = dma.vmem_to_hbm [thread:$0]  %s105, 128, %s2, [#allocation4]
    $region21: #{tpu_custom_call.1} parent=1 // pred_fallthru
      _
    // Predicated region
    $region22: #{tpu_custom_call.1} parent=1 // pred_check
      _
    $region23: #{tpu_custom_call.1} parent=1 // pred_check_branch
      %109 = sbr.rel (0) target = $region25
    $region24: #{tpu_custom_call.1} parent=1 // pred_region
      %s111 = ssub.s32 128, 128
      %112 = vsyncadd [#allocation9], %s111
      %s114 = sshll.u32 [#allocation8], 4
      %s115 = int_to_ptr.vmem [resolvable:$true] %s114
      %117 = dma.vmem_to_hbm [thread:$0]  %s115, 128, %s3, [#allocation9]
    $region25: #{tpu_custom_call.1} parent=1 // pred_fallthru
      _
    // Predicated region
    $region26: #{tpu_custom_call.1} parent=1 // pred_check
      _
    $region27: #{tpu_custom_call.1} parent=1 // pred_check_branch
      %119 = sbr.rel (0) target = $region29
    $region28: #{tpu_custom_call.1} parent=1 // pred_region
      %120 = dma.done [#allocation4], 128
    $region29: #{tpu_custom_call.1} parent=1 // pred_fallthru
      _
    // Predicated region
    $region30: #{tpu_custom_call.1} parent=1 // pred_check
      _
    $region31: #{tpu_custom_call.1} parent=1 // pred_check_branch
      %122 = sbr.rel (0) target = $region33
    $region32: #{tpu_custom_call.1} parent=1 // pred_region
      %123 = dma.done [#allocation9], 128
    $region33: #{tpu_custom_call.1} parent=1 // pred_fallthru
      _
    %124 = vsyncpa [#allocation3], 1
    %125 = vsyncpa [#allocation6], 1
    %126 = vsyncpa [#allocation4], 1
    %127 = vsyncpa [#allocation9], 1

</llo_original>
